<compile_context>
chip_gen: v5e
topology: v5e:2x2
jax: 0.10.0
libtpu: 0.0.40
codegen_flags: <defaults>
</compile_context>

<pallas_src>
import jax
import jax.numpy as jnp
from jax.experimental import pallas as pl
from jax.experimental.pallas import tpu as pltpu


def _round_up(x: int, m: int) -> int:
    return (x + m - 1) // m * m


def _cdiv(a: int, b: int) -> int:
    return -(-a // b)


def _tpu_defaults():
    """(vmem_limit_bytes, row-tile target, assume 2 TensorCores?) per TPU generation."""
    try:
        cap = int(getattr(pltpu.get_tpu_info(), "vmem_capacity_bytes", 64 << 20))
    except Exception:  # pragma: no cover - conservative fallback
        cap = 64 << 20
    if cap >= (100 << 20):           # v5e / v6e: 128 MiB VMEM, 1 TensorCore per chip
        return 96 << 20, 1024, False
    return 44 << 20, 512, True       # v7x-class: 64 MiB VMEM per TC, 2 TCs per chip


def _maybe_pad(a, target_shape):
    pads = tuple((0, t - s) for s, t in zip(a.shape, target_shape))
    if all(p == (0, 0) for p in pads):
        return a                      # already aligned: no extra HBM pass
    return jnp.pad(a, pads)


def _nbytes(a) -> int:
    return a.size * jnp.dtype(a.dtype).itemsize


# ----------------------------------------------------------------------------- kernels
def ffn_kernel_resident(x_ref, w1_ref, b1_ref, w2_ref, b2_ref, o_ref):
    # Weights fully resident in VMEM (constant block index): no accumulator needed.
    cdt = w1_ref.dtype
    h = jnp.dot(x_ref[...].astype(cdt), w1_ref[...],
                preferred_element_type=jnp.float32)
    h = jnp.maximum(h + b1_ref[...].astype(jnp.float32), 0.0)
    # dropout = identity (eval mode)
    out = jnp.dot(h.astype(cdt), w2_ref[...], preferred_element_type=jnp.float32)
    o_ref[...] = (out + b2_ref[...].astype(jnp.float32)).astype(o_ref.dtype)


def ffn_kernel_tiled(x_ref, w1_ref, b1_ref, w2_ref, b2_ref, o_ref, acc_ref):
    # d_ff tiled along grid axis 1 ("arbitrary", last); f32 accumulator in VMEM scratch.
    j = pl.program_id(1)

    @pl.when(j == 0)
    def _():
        acc_ref[...] = jnp.zeros_like(acc_ref)

    cdt = w1_ref.dtype
    h = jnp.dot(x_ref[...].astype(cdt), w1_ref[...],
                preferred_element_type=jnp.float32)
    h = jnp.maximum(h + b1_ref[...].astype(jnp.float32), 0.0)
    # dropout = identity (eval mode)
    acc_ref[...] += jnp.dot(h.astype(cdt), w2_ref[...],
                            preferred_element_type=jnp.float32)

    @pl.when(j == pl.num_programs(1) - 1)
    def _():
        o_ref[...] = (acc_ref[...] +
                      b2_ref[...].astype(jnp.float32)).astype(o_ref.dtype)


# ----------------------------------------------------------------------------- wrapper
def positionwise_feed_forward(x, w1, b1, w2, b2, *, tm=None,
                              vmem_limit_bytes=None, compute_dtype=None,
                              weight_buffers=2):
    """x: (B, S, d_model). w1: (d_model, d_ff), b1: (d_ff,), w2: (d_ff, d_model),
    b2: (d_model,). Returns (B, S, d_model). Eval-mode dropout (identity).
    Call under jax.jit so padding / dtype casts of static weights fold away."""
    B, S, d_model = x.shape
    d_ff = w1.shape[1]
    N = B * S

    if compute_dtype is not None:
        # Cast weights once in the wrapper (halves weight HBM/VMEM traffic for bf16;
        # the kernel keeps MXU inputs in the weight dtype, accumulating in f32).
        w1 = w1.astype(compute_dtype)
        w2 = w2.astype(compute_dtype)

    auto_vmem, auto_tm, multi_core = _tpu_defaults()
    if vmem_limit_bytes is None:
        vmem_limit_bytes = auto_vmem
    if tm is None:
        tm = auto_tm
    usable = (vmem_limit_bytes * 17) // 20          # ~85% of the limit for our tiles

    xbytes = jnp.dtype(x.dtype).itemsize
    wdt = w1.dtype
    wbytes = jnp.dtype(wdt).itemsize
    hbytes = 4 + (wbytes if wdt != jnp.float32 else 0)   # f32 h (+ cast copy if needed)

    # Lane-dense feature padding (multiples of 128).
    d_model_p = _round_up(d_model, 128)
    d_ff_128 = _round_up(d_ff, 128)

    # ---- row tiling: large tiles (weight reuse), balanced so padding stays small.
    N_8 = _round_up(N, 8)
    tm_eff = max(8, min(_round_up(tm, 8), N_8))
    n_i = _cdiv(N_8, tm_eff)
    if multi_core and n_i == 1 and N_8 >= 512:
        n_i = 2                    # keep both v7x TensorCores busy on the parallel axis
    tm_eff = _round_up(_cdiv(N_8, n_i), 8)
    N_p = tm_eff * n_i

    # ---- decide whether both weight matrices stay resident in VMEM.
    def _resident_bytes(t_ff):
        w_b = 2 * (2 * d_model_p * t_ff + t_ff + d_model_p) * wbytes   # 2 bufs each
        io_b = 2 * 2 * tm_eff * d_model_p * xbytes                     # x + out tiles
        h_b = tm_eff * t_ff * hbytes                                   # h intermediate
        return w_b + io_b + h_b

    resident = _resident_bytes(d_ff_128) <= usable

    if resident:
        t_ff = d_ff_p = d_ff_128
        n_j = 1
    else:
        # Derive t_ff from the VMEM budget (weight tiles are the per-step DMAs),
        # shrinking the row tile if the budget is too tight for a useful d_ff tile.
        while True:
            fixed = (2 * 2 * tm_eff * d_model_p * xbytes    # x + out double buffers
                     + tm_eff * d_model_p * 4                # f32 accumulator scratch
                     + 2 * d_model_p * wbytes)               # b2
            per_tff = (weight_buffers * (2 * d_model_p + 1) * wbytes
                       + tm_eff * hbytes)
            t_ff_max = (usable - fixed) // per_tff
            t_ff_max = (t_ff_max // 128) * 128
            if t_ff_max >= 256 or tm_eff <= 128:
                break
            tm_eff = max(128, tm_eff // 2)
            n_i = _cdiv(N_8, tm_eff)
            tm_eff = _round_up(_cdiv(N_8, n_i), 8)
            N_p = tm_eff * n_i
        t_ff_max = max(128, min(t_ff_max, d_ff_128))
        n_j = _cdiv(d_ff_128, t_ff_max)
        t_ff = _round_up(_cdiv(d_ff_128, n_j), 128)           # balanced d_ff tiles
        d_ff_p = t_ff * n_j

    # ---- pad operands (no-ops when already aligned / pre-padded).
    x2 = _maybe_pad(x.reshape(N, d_model), (N_p, d_model_p))
    w1_p = _maybe_pad(w1, (d_model_p, d_ff_p))
    b1_p = _maybe_pad(b1.reshape(1, d_ff), (1, d_ff_p))
    w2_p = _maybe_pad(w2, (d_ff_p, d_model_p))
    b2_p = _maybe_pad(b2.reshape(1, d_model), (1, d_model_p))

    # ---- cost estimate: weights are re-streamed once per row tile when not resident.
    w_stream = _nbytes(w1_p) + _nbytes(b1_p) + _nbytes(w2_p)
    cost = pl.CostEstimate(
        flops=4 * N_p * d_model_p * d_ff_p,
        transcendentals=0,
        bytes_accessed=(_nbytes(x2) + N_p * d_model_p * xbytes + _nbytes(b2_p)
                        + (w_stream if resident else w_stream * n_i)),
    )

    if resident:
        out2 = pl.pallas_call(
            ffn_kernel_resident,
            out_shape=jax.ShapeDtypeStruct((N_p, d_model_p), x.dtype),
            grid_spec=pltpu.PrefetchScalarGridSpec(
                num_scalar_prefetch=0,
                grid=(n_i,),
                in_specs=[
                    pl.BlockSpec((tm_eff, d_model_p), lambda i: (i, 0)),   # x rows
                    pl.BlockSpec((d_model_p, d_ff_p), lambda i: (0, 0)),   # W1 resident
                    pl.BlockSpec((1, d_ff_p), lambda i: (0, 0)),           # b1
                    pl.BlockSpec((d_ff_p, d_model_p), lambda i: (0, 0)),   # W2 resident
                    pl.BlockSpec((1, d_model_p), lambda i: (0, 0)),        # b2
                ],
                out_specs=pl.BlockSpec((tm_eff, d_model_p), lambda i: (i, 0)),
            ),
            compiler_params=pltpu.CompilerParams(
                dimension_semantics=("parallel",),
                vmem_limit_bytes=vmem_limit_bytes),
            cost_estimate=cost,
        )(x2, w1_p, b1_p, w2_p, b2_p)
    else:
        w_kwargs = {} if weight_buffers == 2 else dict(
            pipeline_mode=pl.Buffered(weight_buffers))
        out2 = pl.pallas_call(
            ffn_kernel_tiled,
            out_shape=jax.ShapeDtypeStruct((N_p, d_model_p), x.dtype),
            grid_spec=pltpu.PrefetchScalarGridSpec(
                num_scalar_prefetch=0,
                grid=(n_i, n_j),                     # rows parallel, d_ff reduction last
                in_specs=[
                    pl.BlockSpec((tm_eff, d_model_p), lambda i, j: (i, 0)),       # x
                    pl.BlockSpec((d_model_p, t_ff), lambda i, j: (0, j), **w_kwargs),
                    pl.BlockSpec((1, t_ff), lambda i, j: (0, j)),                 # b1
                    pl.BlockSpec((t_ff, d_model_p), lambda i, j: (j, 0), **w_kwargs),
                    pl.BlockSpec((1, d_model_p), lambda i, j: (0, 0)),            # b2
                ],
                out_specs=pl.BlockSpec((tm_eff, d_model_p), lambda i, j: (i, 0)),
                scratch_shapes=[pltpu.VMEM((tm_eff, d_model_p), jnp.float32)],
            ),
            compiler_params=pltpu.CompilerParams(
                dimension_semantics=("parallel", "arbitrary"),
                vmem_limit_bytes=vmem_limit_bytes),
            cost_estimate=cost,
        )(x2, w1_p, b1_p, w2_p, b2_p)

    return out2[:N, :d_model].reshape(B, S, d_model)


if __name__ == "__main__":
    # Small deterministic setup consistent with the module: batch=2, seq=8,
    # d_model=32, d_ff=64 (resident-weights fast path).
    B, S, d_model, d_ff = 2, 8, 32, 64
    key = jax.random.PRNGKey(0)
    kx, k1, kb1, k2, kb2 = jax.random.split(key, 5)

    x = jax.random.normal(kx, (B, S, d_model), dtype=jnp.float32)
    # nn.Linear(d_model, d_ff): weight (d_ff, d_model) stored pre-transposed as (d_model, d_ff).
    w1 = jax.random.normal(k1, (d_model, d_ff), jnp.float32) / jnp.sqrt(d_model)
    b1 = jax.random.normal(kb1, (d_ff,), jnp.float32) * 0.1
    w2 = jax.random.normal(k2, (d_ff, d_model), jnp.float32) / jnp.sqrt(d_ff)
    b2 = jax.random.normal(kb2, (d_model,), jnp.float32) * 0.1

    out = jax.block_until_ready(positionwise_feed_forward(x, w1, b1, w2, b2))
    ref = jnp.maximum(x @ w1 + b1, 0.0) @ w2 + b2
    assert out.shape == (B, S, d_model)
    assert jnp.allclose(out, ref, atol=1e-5, rtol=1e-5)

    # Exercise the d_ff-tiled (non-resident-weights) path with a tight VMEM budget.
    d_model2, d_ff2 = 128, 4096
    kx2, k12, kb12, k22, kb22 = jax.random.split(jax.random.PRNGKey(1), 5)
    x_b = jax.random.normal(kx2, (B, S, d_model2), jnp.float32)
    w1_b = jax.random.normal(k12, (d_model2, d_ff2), jnp.float32) / jnp.sqrt(d_model2)
    b1_b = jax.random.normal(kb12, (d_ff2,), jnp.float32) * 0.1
    w2_b = jax.random.normal(k22, (d_ff2, d_model2), jnp.float32) / jnp.sqrt(d_ff2)
    b2_b = jax.random.normal(kb22, (d_model2,), jnp.float32) * 0.1

    out_b = jax.block_until_ready(
        positionwise_feed_forward(x_b, w1_b, b1_b, w2_b, b2_b,
                                  vmem_limit_bytes=4 * 1024 * 1024))
    ref_b = jnp.maximum(x_b @ w1_b + b1_b, 0.0) @ w2_b + b2_b
    assert out_b.shape == (B, S, d_model2)
    assert jnp.allclose(out_b, ref_b, atol=2e-3, rtol=2e-3)

    print("KERNEL_OK")
</pallas_src>

<mosaic_0001>
module attributes {stable_mosaic.version = 11 : i64} {
  func.func @ffn_kernel_resident(%arg0: i32, %arg1: memref<16x128xf32, #tpu.memory_space<vmem>>, %arg2: memref<128x128xf32, #tpu.memory_space<vmem>>, %arg3: memref<1x128xf32, #tpu.memory_space<vmem>>, %arg4: memref<128x128xf32, #tpu.memory_space<vmem>>, %arg5: memref<1x128xf32, #tpu.memory_space<vmem>>, %arg6: memref<16x128xf32, #tpu.memory_space<vmem>>) attributes {dimension_semantics = [#tpu.dimension_semantics<parallel>], iteration_bounds = array<i64: 1>, scalar_prefetch = 0 : i64, scratch_operands = 0 : i64, tpu.core_type = #tpu.core_type<tc>, window_params = [{transform_indices = @transform_0, window_bounds = array<i64: 16, 128>}, {pipeline_mode = #tpu.pipeline_mode<synchronous>, transform_indices = @transform_1, window_bounds = array<i64: 128, 128>}, {pipeline_mode = #tpu.pipeline_mode<synchronous>, transform_indices = @transform_2, window_bounds = array<i64: 1, 128>}, {pipeline_mode = #tpu.pipeline_mode<synchronous>, transform_indices = @transform_3, window_bounds = array<i64: 128, 128>}, {pipeline_mode = #tpu.pipeline_mode<synchronous>, transform_indices = @transform_4, window_bounds = array<i64: 1, 128>}, {transform_indices = @transform_5, window_bounds = array<i64: 16, 128>}]} {
    %c0 = arith.constant 0 : index
    %c0_0 = arith.constant 0 : index
    %0 = vector.load %arg1[%c0, %c0_0] : memref<16x128xf32, #tpu.memory_space<vmem>>, vector<16x128xf32>
    %c0_1 = arith.constant 0 : index
    %c0_2 = arith.constant 0 : index
    %1 = vector.load %arg2[%c0_1, %c0_2] : memref<128x128xf32, #tpu.memory_space<vmem>>, vector<128x128xf32>
    %cst = arith.constant dense<0.000000e+00> : vector<16x128xf32>
    %2 = tpu.matmul %0, %1, %cst {dimension_numbers = #tpu.dot_dimension_numbers<[1], [0], [0], [1], [0, 0, 1, 1], [], []>} : vector<16x128xf32>, vector<128x128xf32>, vector<16x128xf32> -> vector<16x128xf32>
    %c0_3 = arith.constant 0 : index
    %c0_4 = arith.constant 0 : index
    %3 = vector.load %arg3[%c0_3, %c0_4] : memref<1x128xf32, #tpu.memory_space<vmem>>, vector<1x128xf32>
    %4 = vector.broadcast %3 : vector<1x128xf32> to vector<16x128xf32>
    %5 = arith.addf %2, %4 : vector<16x128xf32>
    %cst_5 = arith.constant 0.000000e+00 : f32
    %6 = vector.broadcast %cst_5 : f32 to vector<16x128xf32>
    %7 = arith.maximumf %5, %6 : vector<16x128xf32>
    %c0_6 = arith.constant 0 : index
    %c0_7 = arith.constant 0 : index
    %8 = vector.load %arg4[%c0_6, %c0_7] : memref<128x128xf32, #tpu.memory_space<vmem>>, vector<128x128xf32>
    %cst_8 = arith.constant dense<0.000000e+00> : vector<16x128xf32>
    %9 = tpu.matmul %7, %8, %cst_8 {dimension_numbers = #tpu.dot_dimension_numbers<[1], [0], [0], [1], [0, 0, 1, 1], [], []>} : vector<16x128xf32>, vector<128x128xf32>, vector<16x128xf32> -> vector<16x128xf32>
    %c0_9 = arith.constant 0 : index
    %c0_10 = arith.constant 0 : index
    %10 = vector.load %arg5[%c0_9, %c0_10] : memref<1x128xf32, #tpu.memory_space<vmem>>, vector<1x128xf32>
    %11 = vector.broadcast %10 : vector<1x128xf32> to vector<16x128xf32>
    %12 = arith.addf %9, %11 : vector<16x128xf32>
    %c0_11 = arith.constant 0 : index
    %c0_12 = arith.constant 0 : index
    %13 = vector.load %arg6[%c0_11, %c0_12] : memref<16x128xf32, #tpu.memory_space<vmem>>, vector<16x128xf32>
    tpu.vector_store %arg6[%c0_11, %c0_12], %12 {strides = array<i32>} : memref<16x128xf32, #tpu.memory_space<vmem>>, vector<16x128xf32>,
    return
  }
  func.func @transform_0(%arg0: i32) -> (i32, i32) {
    %c0_i32 = arith.constant 0 : i32
    %c0_i32_0 = arith.constant 0 : i32
    return %arg0, %c0_i32 : i32, i32
  }
  func.func @transform_1(%arg0: i32) -> (i32, i32) {
    %c0_i32 = arith.constant 0 : i32
    %c0_i32_0 = arith.constant 0 : i32
    %c0_i32_1 = arith.constant 0 : i32
    return %c0_i32, %c0_i32_0 : i32, i32
  }
  func.func @transform_2(%arg0: i32) -> (i32, i32) {
    %c0_i32 = arith.constant 0 : i32
    %c0_i32_0 = arith.constant 0 : i32
    %c0_i32_1 = arith.constant 0 : i32
    return %c0_i32, %c0_i32_0 : i32, i32
  }
  func.func @transform_3(%arg0: i32) -> (i32, i32) {
    %c0_i32 = arith.constant 0 : i32
    %c0_i32_0 = arith.constant 0 : i32
    %c0_i32_1 = arith.constant 0 : i32
    return %c0_i32, %c0_i32_0 : i32, i32
  }
  func.func @transform_4(%arg0: i32) -> (i32, i32) {
    %c0_i32 = arith.constant 0 : i32
    %c0_i32_0 = arith.constant 0 : i32
    %c0_i32_1 = arith.constant 0 : i32
    return %c0_i32, %c0_i32_0 : i32, i32
  }
  func.func @transform_5(%arg0: i32) -> (i32, i32) {
    %c0_i32 = arith.constant 0 : i32
    %c0_i32_0 = arith.constant 0 : i32
    return %arg0, %c0_i32 : i32, i32
  }
}

</mosaic_0001>

<llo_original>
// kernel: tpu_custom_call.1
$region0: #{tpu_custom_call.1}
  #allocation0 [shape = 'u32[]', space=smem, size = 0x4, offset = 0x4, fixed_abs, tag = 'smem constant byte address 0x4 - core index']
  #allocation1 [shape = 'u32[72,128]{1,0:T(1,128)}', space=vmem, size = 0x9000, scoped, tag = 'internal scratch']
  %s0 = inlined_call_operand.hbm [shape: f32[16,128], index: 0, kind: input, shape index: {}]
  %s1 = inlined_call_operand.hbm [shape: f32[128,128], index: 1, kind: input, shape index: {}]
  %s2 = inlined_call_operand.vmem [shape: f32[1,128], index: 2, kind: input, shape index: {}]
  %s3 = inlined_call_operand.hbm [shape: f32[128,128], index: 3, kind: input, shape index: {}]
  %s4 = inlined_call_operand.vmem [shape: f32[1,128], index: 4, kind: input, shape index: {}]
  %s5 = inlined_call_operand.hbm [shape: f32[16,128], index: 5, kind: output, shape index: {}]
  %s6 = sld [smem:[#allocation0]]
  $region42: #{tpu_custom_call.1} parent=0
    _
  %s8 = ssub.s32 1, %s6
  %s9 = scalar_select 0, %s8, %s6
  $region1: #{tpu_custom_call.1} parent=0
    #allocation2 [shape = 'u8[8192]{0}', space=vmem, size = 0x2000, scoped, tag = 'input window, operand 0, single buffered']
    #allocation3 [shape = 's32[1]{0}', space=sflag, size = 0x4, scoped, tag = 'scoped memory for tpu_custom_call.1']
    #allocation4 [shape = 's32[1]{0}', space=sflag, size = 0x4, scoped, tag = 'scoped memory for tpu_custom_call.1']
    #allocation5 [shape = 'u8[65536]{0}', space=vmem, size = 0x10000, scoped, tag = 'input window, operand 1, single buffered']
    #allocation6 [shape = 's32[1]{0}', space=sflag, size = 0x4, scoped, tag = 'scoped memory for tpu_custom_call.1']
    #allocation7 [shape = 'u8[65536]{0}', space=vmem, size = 0x10000, scoped, tag = 'input window, operand 3, single buffered']
    #allocation8 [shape = 'u8[8192]{0}', space=vmem, size = 0x2000, scoped, tag = 'output window, operand 0, single buffered']
    %10 = vsyncpa [#allocation3], 0
    %11 = vsyncpa [#allocation6], 0
    %12 = vsyncpa [#allocation4], 0
    // Predicated region
    $region2: #{tpu_custom_call.1} parent=1 // pred_check
      _
    $region3: #{tpu_custom_call.1} parent=1 // pred_check_branch
      %14 = sbr.rel (0) target = $region5
    $region4: #{tpu_custom_call.1} parent=1 // pred_region
      %16 = vsyncadd [#allocation3], 0
      %s17 = sshll.u32 %s0, 4
      %s18 = int_to_ptr.hbm [resolvable:$true] %s17
      %s19 = sshll.u32 [#allocation2], 4
      %s20 = int_to_ptr.vmem [resolvable:$true] %s19
      %25 = dma.hbm_to_vmem [thread:$0]  %s18, 256, %s20, [#allocation3], 128, 128, 8
    $region5: #{tpu_custom_call.1} parent=1 // pred_fallthru
      _
    // Predicated region
    $region6: #{tpu_custom_call.1} parent=1 // pred_check
      _
    $region7: #{tpu_custom_call.1} parent=1 // pred_check_branch
      %27 = sbr.rel (0) target = $region9
    $region8: #{tpu_custom_call.1} parent=1 // pred_region
      %29 = vsyncadd [#allocation6], 0
      %s30 = sshll.u32 %s1, 4
      %s31 = int_to_ptr.hbm [resolvable:$true] %s30
      %s32 = sshll.u32 [#allocation5], 4
      %s33 = int_to_ptr.vmem [resolvable:$true] %s32
      %38 = dma.hbm_to_vmem [thread:$0]  %s31, 2048, %s33, [#allocation6], 128, 128, 8
    $region9: #{tpu_custom_call.1} parent=1 // pred_fallthru
      _
    // Predicated region
    $region10: #{tpu_custom_call.1} parent=1 // pred_check
      _
    $region11: #{tpu_custom_call.1} parent=1 // pred_check_branch
      %40 = sbr.rel (0) target = $region13
    $region12: #{tpu_custom_call.1} parent=1 // pred_region
      _
    $region13: #{tpu_custom_call.1} parent=1 // pred_fallthru
      _
    // Predicated region
    $region14: #{tpu_custom_call.1} parent=1 // pred_check
      _
    $region15: #{tpu_custom_call.1} parent=1 // pred_check_branch
      %42 = sbr.rel (0) target = $region17
    $region16: #{tpu_custom_call.1} parent=1 // pred_region
      %44 = vsyncadd [#allocation6], 0
      %s45 = sshll.u32 %s3, 4
      %s46 = int_to_ptr.hbm [resolvable:$true] %s45
      %s47 = sshll.u32 [#allocation7], 4
      %s48 = int_to_ptr.vmem [resolvable:$true] %s47
      %53 = dma.hbm_to_vmem [thread:$0]  %s46, 2048, %s48, [#allocation6], 128, 128, 8
    $region17: #{tpu_custom_call.1} parent=1 // pred_fallthru
      _
    // Predicated region
    $region18: #{tpu_custom_call.1} parent=1 // pred_check
      _
    $region19: #{tpu_custom_call.1} parent=1 // pred_check_branch
      %55 = sbr.rel (0) target = $region21
    $region20: #{tpu_custom_call.1} parent=1 // pred_region
      _
    $region21: #{tpu_custom_call.1} parent=1 // pred_fallthru
      _
    // Predicated region
    $region22: #{tpu_custom_call.1} parent=1 // pred_check
      _
    $region23: #{tpu_custom_call.1} parent=1 // pred_check_branch
      %57 = sbr.rel (0) target = $region25
    $region24: #{tpu_custom_call.1} parent=1 // pred_region
      %59 = dma.done [#allocation3], 256
    $region25: #{tpu_custom_call.1} parent=1 // pred_fallthru
      _
    // Predicated region
    $region26: #{tpu_custom_call.1} parent=1 // pred_check
      _
    $region27: #{tpu_custom_call.1} parent=1 // pred_check_branch
      %61 = sbr.rel (0) target = $region29
    $region28: #{tpu_custom_call.1} parent=1 // pred_region
      %63 = dma.done [#allocation6], 2048
    $region29: #{tpu_custom_call.1} parent=1 // pred_fallthru
      _
    // Predicated region
    $region30: #{tpu_custom_call.1} parent=1 // pred_check
      _
    $region31: #{tpu_custom_call.1} parent=1 // pred_check_branch
      %65 = sbr.rel (0) target = $region33
    $region32: #{tpu_custom_call.1} parent=1 // pred_region
      %67 = dma.done [#allocation6], 2048
    $region33: #{tpu_custom_call.1} parent=1 // pred_fallthru
      _
    %v68 = vld [vmem:[#allocation2] sm:$0xff]
    %v69 = vld [vmem:[#allocation2 + $0x8] sm:$0xff]
    %v70 = vld [vmem:[#allocation5] sm:$0xff]
    %v71 = vld [vmem:[#allocation5 + $0x8] sm:$0xff]
    %v72 = vld [vmem:[#allocation5 + $0x10] sm:$0xff]
    %v73 = vld [vmem:[#allocation5 + $0x18] sm:$0xff]
    %v74 = vld [vmem:[#allocation5 + $0x20] sm:$0xff]
    %v75 = vld [vmem:[#allocation5 + $0x28] sm:$0xff]
    %v76 = vld [vmem:[#allocation5 + $0x30] sm:$0xff]
    %v77 = vld [vmem:[#allocation5 + $0x38] sm:$0xff]
    %v78 = vld [vmem:[#allocation5 + $0x40] sm:$0xff]
    %v79 = vld [vmem:[#allocation5 + $0x48] sm:$0xff]
    %v80 = vld [vmem:[#allocation5 + $0x50] sm:$0xff]
    %v81 = vld [vmem:[#allocation5 + $0x58] sm:$0xff]
    %v82 = vld [vmem:[#allocation5 + $0x60] sm:$0xff]
    %v83 = vld [vmem:[#allocation5 + $0x68] sm:$0xff]
    %v84 = vld [vmem:[#allocation5 + $0x70] sm:$0xff]
    %v85 = vld [vmem:[#allocation5 + $0x78] sm:$0xff]
    %v86 = vld [vmem:[%s2] sm:$0x1]
    %v88 = vperm.slane %v86, 0
    %90 = vmatpush.msra.mxu0 %v85
    %91 = vmatpush.msra.mxu0 %v84
    %92 = vmatpush.msra.mxu0 %v83
    %93 = vmatpush.msra.mxu0 %v82
    %94 = vmatpush.msra.mxu0 %v81
    %95 = vmatpush.msra.mxu0 %v80
    %96 = vmatpush.msra.mxu0 %v79
    %97 = vmatpush.msra.mxu0 %v78
    %98 = vmatpush.msra.mxu0 %v77
    %99 = vmatpush.msra.mxu0 %v76
    %100 = vmatpush.msra.mxu0 %v75
    %101 = vmatpush.msra.mxu0 %v74
    %102 = vmatpush.msra.mxu0 %v73
    %103 = vmatpush.msra.mxu0 %v72
    %104 = vmatpush.msra.mxu0 %v71
    %105 = vmatpush.msra.mxu0 %v70
    %106 = vmatmul.f32.gmra.mxu0 %v68
    %v107 = vpop.f32.mrf.mxu0
    %v108 = vadd.f32 %v88, %v107
    %109 = vmatmul.f32.gmra.mxu0 %v69
    %v110 = vpop.f32.mrf.mxu0
    %v111 = vadd.f32 %v88, %v110
    %112 = vdwg.mxu0
    %v113 = vmax.f32 %v108, 0.0
    %v114 = vmax.f32 %v111, 0.0
    %v115 = vld [vmem:[#allocation7] sm:$0xff]
    %v116 = vld [vmem:[#allocation7 + $0x8] sm:$0xff]
    %v117 = vld [vmem:[#allocation7 + $0x10] sm:$0xff]
    %v118 = vld [vmem:[#allocation7 + $0x18] sm:$0xff]
    %v119 = vld [vmem:[#allocation7 + $0x20] sm:$0xff]
    %v120 = vld [vmem:[#allocation7 + $0x28] sm:$0xff]
    %v121 = vld [vmem:[#allocation7 + $0x30] sm:$0xff]
    %v122 = vld [vmem:[#allocation7 + $0x38] sm:$0xff]
    %v123 = vld [vmem:[#allocation7 + $0x40] sm:$0xff]
    %v124 = vld [vmem:[#allocation7 + $0x48] sm:$0xff]
    %v125 = vld [vmem:[#allocation7 + $0x50] sm:$0xff]
    %v126 = vld [vmem:[#allocation7 + $0x58] sm:$0xff]
    %v127 = vld [vmem:[#allocation7 + $0x60] sm:$0xff]
    %v128 = vld [vmem:[#allocation7 + $0x68] sm:$0xff]
    %v129 = vld [vmem:[#allocation7 + $0x70] sm:$0xff]
    %v130 = vld [vmem:[#allocation7 + $0x78] sm:$0xff]
    %v131 = vld [vmem:[%s4] sm:$0x1]
    %v133 = vperm.slane %v131, 0
    %135 = vmatpush.msra.mxu0 %v130
    %136 = vmatpush.msra.mxu0 %v129
    %137 = vmatpush.msra.mxu0 %v128
    %138 = vmatpush.msra.mxu0 %v127
    %139 = vmatpush.msra.mxu0 %v126
    %140 = vmatpush.msra.mxu0 %v125
    %141 = vmatpush.msra.mxu0 %v124
    %142 = vmatpush.msra.mxu0 %v123
    %143 = vmatpush.msra.mxu0 %v122
    %144 = vmatpush.msra.mxu0 %v121
    %145 = vmatpush.msra.mxu0 %v120
    %146 = vmatpush.msra.mxu0 %v119
    %147 = vmatpush.msra.mxu0 %v118
    %148 = vmatpush.msra.mxu0 %v117
    %149 = vmatpush.msra.mxu0 %v116
    %150 = vmatpush.msra.mxu0 %v115
    %151 = vmatmul.f32.gmra.mxu0 %v113
    %v152 = vpop.f32.mrf.mxu0
    %v153 = vadd.f32 %v133, %v152
    %154 = vmatmul.f32.gmra.mxu0 %v114
    %v155 = vpop.f32.mrf.mxu0
    %v156 = vadd.f32 %v133, %v155
    %157 = vdwg.mxu0
    %158 = vst [vmem:[#allocation8] sm:$0xff] %v153
    %159 = vst [vmem:[#allocation8 + $0x8] sm:$0xff] %v156
    // Predicated region
    $region34: #{tpu_custom_call.1} parent=1 // pred_check
      _
    $region35: #{tpu_custom_call.1} parent=1 // pred_check_branch
      %161 = sbr.rel (0) target = $region37
    $region36: #{tpu_custom_call.1} parent=1 // pred_region
      %163 = vsyncadd [#allocation4], 0
      %s164 = sshll.u32 [#allocation8], 4
      %s165 = int_to_ptr.vmem [resolvable:$true] %s164
      %s166 = sshll.u32 %s5, 4
      %s167 = int_to_ptr.hbm [resolvable:$true] %s166
      %172 = dma.vmem_to_hbm [thread:$0]  %s165, 256, %s167, [#allocation4], 128, 128, 8
    $region37: #{tpu_custom_call.1} parent=1 // pred_fallthru
      _
    // Predicated region
    $region38: #{tpu_custom_call.1} parent=1 // pred_check
      _
    $region39: #{tpu_custom_call.1} parent=1 // pred_check_branch
      %174 = sbr.rel (0) target = $region41
    $region40: #{tpu_custom_call.1} parent=1 // pred_region
      %176 = dma.done [#allocation4], 256
    $region41: #{tpu_custom_call.1} parent=1 // pred_fallthru
      _
    %177 = vsyncpa [#allocation3], 1
    %178 = vsyncpa [#allocation6], 1
    %179 = vsyncpa [#allocation4], 1

</llo_original>
